<compile_context>
chip_gen: v7x
topology: tpu7x:2x2x1
jax: 0.10.0
libtpu: 0.0.40
codegen_flags: <defaults>
</compile_context>

<pallas_src>
import functools
import math

import jax
import jax.numpy as jnp
from jax import lax
from jax.experimental import pallas as pl
from jax.experimental.pallas import tpu as pltpu


def _attn_kernel(inp_ref, ctx_ref, w_in_ref, w_out_ref,
                 attn_ref, align_ref,
                 q_scr, m_scr, l_scr, cacc_scr, scores_scr,
                 *, valid_s: int):
    j = pl.program_id(1)
    n_sc = pl.num_programs(1)

    ctx = ctx_ref[...]                       # (tb, sc, d)  native dtype
    tb, sc, d = ctx.shape
    s_pad = scores_scr.shape[1]

    # ---- per-batch-tile init: q = linear_in(x) on the MXU -------------------
    @pl.when(j == 0)
    def _init():
        x = inp_ref[...]                                             # (tb, d)
        # x @ W_in^T  (contract the input-feature axes; weight untransposed)
        q = lax.dot_general(x, w_in_ref[...],
                            (((1,), (1,)), ((), ())),
                            preferred_element_type=jnp.float32)      # (tb, d) f32
        q_scr[...] = q.astype(q_scr.dtype)[:, None, :]               # (tb, 1, d)
        m_scr[...] = jnp.full(m_scr.shape, -jnp.inf, m_scr.dtype)
        l_scr[...] = jnp.zeros(l_scr.shape, l_scr.dtype)
        cacc_scr[...] = jnp.zeros(cacc_scr.shape, cacc_scr.dtype)

    # ---- scores for this S chunk: batched MXU contraction over D ------------
    s_j = jnp.einsum('bqd,bkd->bqk', q_scr[...], ctx,
                     preferred_element_type=jnp.float32)[:, 0, :]    # (tb, sc) f32

    if s_pad != valid_s:     # static: S was padded -> mask padded lanes
        col = j * sc + lax.broadcasted_iota(jnp.int32, s_j.shape, 1)
        s_j = jnp.where(col < valid_s, s_j, -jnp.inf)

    # stash raw scores (needed to emit the full align vector at finalize)
    off = pl.multiple_of(j * sc, 128)
    scores_scr[:, pl.ds(off, sc)] = s_j

    # ---- online softmax update ----------------------------------------------
    m_prev = m_scr[...]                                              # (tb, 1)
    m_new = jnp.maximum(m_prev, jnp.max(s_j, axis=-1, keepdims=True))
    alpha = jnp.exp(m_prev - m_new)                                  # (tb, 1)
    p_j = jnp.exp(s_j - m_new)                                       # (tb, sc) f32
    l_scr[...] = alpha * l_scr[...] + jnp.sum(p_j, axis=-1, keepdims=True)
    # c-chunk on the MXU: batched contraction over this S chunk
    c_j = jnp.einsum('bqk,bkd->bqd', p_j.astype(ctx.dtype)[:, None, :], ctx,
                     preferred_element_type=jnp.float32)             # (tb, 1, d)
    cacc_scr[...] = alpha[:, :, None] * cacc_scr[...] + c_j
    m_scr[...] = m_new

    # ---- finalize on the last S chunk ----------------------------------------
    @pl.when(j == n_sc - 1)
    def _fin():
        x = inp_ref[...]                                             # (tb, d)
        d_model = x.shape[-1]
        inv_l = 1.0 / l_scr[...]                                     # exact (tb, 1)
        align = jnp.exp(scores_scr[...] - m_scr[...]) * inv_l        # (tb, s_pad)
        align_ref[...] = align.astype(align_ref.dtype)

        c = (cacc_scr[...][:, 0, :] * inv_l).astype(x.dtype)         # (tb, d)
        w_out = w_out_ref[...]                                       # (d, 2d)
        if d_model % 128 == 0:
            # lane-aligned: fuse into one (tb, 2d) x (d, 2d)^T MXU pass
            cat = jnp.concatenate([c, x], axis=-1)                   # (tb, 2d)
            h = lax.dot_general(cat, w_out, (((1,), (1,)), ((), ())),
                                preferred_element_type=jnp.float32)
        else:
            # D < 128: split halves of linear_out.weight, avoid unaligned concat
            h = (lax.dot_general(c, w_out[:, :d_model],
                                 (((1,), (1,)), ((), ())),
                                 preferred_element_type=jnp.float32)
                 + lax.dot_general(x, w_out[:, d_model:],
                                   (((1,), (1,)), ((), ())),
                                   preferred_element_type=jnp.float32))
        attn_ref[...] = jnp.tanh(h).astype(attn_ref.dtype)


def _generation_budgets():
    """(tiling budget, vmem_limit_bytes) per TPU generation."""
    cap = 128 << 20
    try:
        info = pltpu.get_tpu_info()
        c = getattr(info, "vmem_capacity_bytes", None)
        if c:
            cap = int(c)
    except Exception:
        pass
    if cap <= (64 << 20):               # v7x-class core: 64 MiB physical VMEM
        return 26 << 20, 48 << 20
    return 88 << 20, 100 << 20          # v5e / v6e: 128 MiB physical VMEM


def attn_forward(inp, ctx, w_in, w_out):
    """inp: (B, D), ctx: (B, S, D), w_in: (D, D) [linear_in.weight],
    w_out: (D, 2D) [linear_out.weight].  Returns (attn_h (B, D), align (B, S))."""
    b, d = inp.shape
    _, s, d2 = ctx.shape
    assert d2 == d and w_in.shape == (d, d) and w_out.shape == (d, 2 * d)
    itemsize = jnp.dtype(inp.dtype).itemsize

    tile_budget, vmem_cap = _generation_budgets()

    # --- S chunking: lane-dense 512-wide chunks, shrunk if 8 double-buffered
    #     batch rows of a chunk would blow ~half the tiling budget. ------------
    s128 = max(128, ((s + 127) // 128) * 128)
    max_chunk = (tile_budget // 2) // max(2 * 8 * d * itemsize, 1)
    s_chunk = int(min(512, s128, max(128, (max_chunk // 128) * 128)))
    s_pad = int(pl.cdiv(s128, s_chunk)) * s_chunk
    if s_pad != s:
        ctx = jnp.pad(ctx, ((0, 0), (0, s_pad - s), (0, 0)))   # zeros, masked in-kernel

    # --- batch tile: fill the tiling budget, keep >=2 grid steps when B>=16 ---
    w_bytes = 2 * 3 * d * d * itemsize                 # resident weights (dbl-buffered)
    per_row = (2 * s_chunk * d * itemsize              # ctx chunk, double-buffered
               + 4 * d * itemsize                      # inp + attn_h blocks
               + 2 * s_pad * itemsize                  # align out block
               + s_pad * 4                             # raw-score scratch (f32)
               + d * (itemsize + 4) + 32)              # q scratch + c accumulator + m/l
    tb = (tile_budget - w_bytes - (2 << 20)) // max(per_row, 1)
    tb = max(8, tb)
    tb = min(tb, b, 1024)
    if b >= 16:
        tb = min(tb, pl.cdiv(b, 2))                    # >=2 batch steps (v7x megacore)
    if tb < b:
        tb = max(8, (tb // 8) * 8)
    tb = int(tb)

    grid = (pl.cdiv(b, tb), s_pad // s_chunk)

    vmem_need = w_bytes + tb * per_row + (6 << 20)
    vmem_limit = int(min(max(vmem_need, 32 << 20), vmem_cap))

    flops = b * (6 * d * d + 4 * s_pad * d)
    trans = b * (2 * s_pad + d)
    nbytes = itemsize * (2 * b * d + b * s_pad * d + 3 * d * d + b * s_pad)

    kernel = functools.partial(_attn_kernel, valid_s=s)

    attn_h, align_padded = pl.pallas_call(
        kernel,
        grid=grid,
        in_specs=[
            pl.BlockSpec((tb, d), lambda i, j: (i, 0)),
            pl.BlockSpec((tb, s_chunk, d), lambda i, j: (i, j, 0)),
            pl.BlockSpec((d, d), lambda i, j: (0, 0)),        # weights: constant block,
            pl.BlockSpec((d, 2 * d), lambda i, j: (0, 0)),    # DMA'd once, VMEM-resident
        ],
        out_specs=(
            pl.BlockSpec((tb, d), lambda i, j: (i, 0)),
            pl.BlockSpec((tb, s_pad), lambda i, j: (i, 0)),
        ),
        out_shape=(
            jax.ShapeDtypeStruct((b, d), inp.dtype),
            jax.ShapeDtypeStruct((b, s_pad), inp.dtype),
        ),
        scratch_shapes=[
            pltpu.VMEM((tb, 1, d), inp.dtype),      # q = linear_in(x)
            pltpu.VMEM((tb, 1), jnp.float32),       # running max
            pltpu.VMEM((tb, 1), jnp.float32),       # running denom
            pltpu.VMEM((tb, 1, d), jnp.float32),    # running c accumulator
            pltpu.VMEM((tb, s_pad), jnp.float32),   # raw scores (for align output)
        ],
        compiler_params=pltpu.CompilerParams(
            dimension_semantics=("parallel", "arbitrary"),
            vmem_limit_bytes=vmem_limit,
        ),
        cost_estimate=pl.CostEstimate(
            flops=int(flops),
            transcendentals=int(trans),
            bytes_accessed=int(nbytes),
        ),
    )(inp, ctx, w_in, w_out)

    return attn_h, align_padded[:, :s]


def _reference(inp, ctx, w_in, w_out):
    # Pure-JAX reference mirroring the PyTorch forward exactly.
    x = inp[:, None, :]                                   # (B, 1, D)
    q = x @ w_in.T                                        # linear_in
    align = jnp.einsum('btd,bsd->bts', q, ctx)            # bmm(h_t, h_s^T)
    align_v = jax.nn.softmax(align, axis=-1)
    c = jnp.einsum('bts,bsd->btd', align_v, ctx)
    concat = jnp.concatenate([c, x], axis=-1)             # (B, 1, 2D)
    attn_h = jnp.tanh(concat @ w_out.T)
    return attn_h[:, 0, :], align_v[:, 0, :]


def _run_case(key, b, s, d):
    k1, k2, k3, k4 = jax.random.split(key, 4)
    inp = jax.random.normal(k1, (b, d), dtype=jnp.float32)
    ctx = jax.random.normal(k2, (b, s, d), dtype=jnp.float32)

    # nn.Linear-style init U(-1/sqrt(fan_in), +1/sqrt(fan_in)), deterministic.
    bound_in = 1.0 / math.sqrt(d)
    bound_out = 1.0 / math.sqrt(2 * d)
    w_in = jax.random.uniform(k3, (d, d), jnp.float32, -bound_in, bound_in)
    w_out = jax.random.uniform(k4, (d, 2 * d), jnp.float32, -bound_out, bound_out)

    attn_h, align = attn_forward(inp, ctx, w_in, w_out)
    jax.block_until_ready((attn_h, align))

    ref_h, ref_a = _reference(inp, ctx, w_in, w_out)
    assert attn_h.shape == (b, d) and align.shape == (b, s)
    assert jnp.allclose(attn_h, ref_h, atol=2e-3, rtol=2e-3), "attn_h mismatch"
    assert jnp.allclose(align, ref_a, atol=2e-3, rtol=2e-3), "align mismatch"
    assert jnp.allclose(jnp.sum(align, axis=-1), 1.0, atol=1e-3), "softmax not normalized"
    assert bool(jnp.all(jnp.isfinite(attn_h))) and bool(jnp.all(jnp.isfinite(align)))


if __name__ == "__main__":
    key = jax.random.PRNGKey(0)
    k1, k2, k3, k4 = jax.random.split(key, 4)
    _run_case(k1, b=2, s=8, d=32)      # tiny spec-like shapes; S padded + masked
    _run_case(k2, b=4, s=128, d=64)    # lane-dense S, single chunk, split out-proj
    _run_case(k3, b=4, s=96, d=128)    # lane-aligned D: fused output projection
    _run_case(k4, b=20, s=640, d=32)   # multi S-chunk online softmax + partial batch tile
    print("KERNEL_OK")
</pallas_src>

<mosaic_0001>
module attributes {stable_mosaic.version = 11 : i64} {
  func.func @_attn_kernel(%arg0: i32, %arg1: i32, %arg2: memref<2x32xf32, #tpu.memory_space<vmem>>, %arg3: memref<2x128x32xf32, #tpu.memory_space<vmem>>, %arg4: memref<32x32xf32, #tpu.memory_space<vmem>>, %arg5: memref<32x64xf32, #tpu.memory_space<vmem>>, %arg6: memref<2x32xf32, #tpu.memory_space<vmem>>, %arg7: memref<2x128xf32, #tpu.memory_space<vmem>>, %arg8: memref<2x1x32xf32, #tpu.memory_space<vmem>>, %arg9: memref<2x1xf32, #tpu.memory_space<vmem>>, %arg10: memref<2x1xf32, #tpu.memory_space<vmem>>, %arg11: memref<2x1x32xf32, #tpu.memory_space<vmem>>, %arg12: memref<2x128xf32, #tpu.memory_space<vmem>>) attributes {dimension_semantics = [#tpu.dimension_semantics<parallel>, #tpu.dimension_semantics<arbitrary>], iteration_bounds = array<i64: 1, 1>, scalar_prefetch = 0 : i64, scratch_operands = 5 : i64, tpu.core_type = #tpu.core_type<tc>, window_params = [{transform_indices = @transform_0, window_bounds = array<i64: 2, 32>}, {transform_indices = @transform_1, window_bounds = array<i64: 2, 128, 32>}, {pipeline_mode = #tpu.pipeline_mode<synchronous>, transform_indices = @transform_2, window_bounds = array<i64: 32, 32>}, {pipeline_mode = #tpu.pipeline_mode<synchronous>, transform_indices = @transform_3, window_bounds = array<i64: 32, 64>}, {transform_indices = @transform_4, window_bounds = array<i64: 2, 32>}, {transform_indices = @transform_5, window_bounds = array<i64: 2, 128>}]} {
    %c0 = arith.constant 0 : index
    %c0_0 = arith.constant 0 : index
    %c0_1 = arith.constant 0 : index
    %0 = vector.load %arg3[%c0, %c0_0, %c0_1] : memref<2x128x32xf32, #tpu.memory_space<vmem>>, vector<2x128x32xf32>
    %c0_i32 = arith.constant 0 : i32
    %1 = arith.cmpi eq, %arg1, %c0_i32 : i32
    %2 = arith.extui %1 : i1 to i32
    %c0_i32_2 = arith.constant 0 : i32
    %3 = arith.cmpi ne, %2, %c0_i32_2 : i32
    scf.if %3 {
      %c0_28 = arith.constant 0 : index
      %c0_29 = arith.constant 0 : index
      %46 = vector.load %arg2[%c0_28, %c0_29] : memref<2x32xf32, #tpu.memory_space<vmem>>, vector<2x32xf32>
      %c0_30 = arith.constant 0 : index
      %c0_31 = arith.constant 0 : index
      %47 = vector.load %arg4[%c0_30, %c0_31] : memref<32x32xf32, #tpu.memory_space<vmem>>, vector<32x32xf32>
      %cst_32 = arith.constant dense<0.000000e+00> : vector<2x32xf32>
      %48 = tpu.matmul %46, %47, %cst_32 {dimension_numbers = #tpu.dot_dimension_numbers<[1], [1], [0], [0], [0, 0, 1, 0], [], []>} : vector<2x32xf32>, vector<32x32xf32>, vector<2x32xf32> -> vector<2x32xf32>
      %49 = vector.shape_cast %48 : vector<2x32xf32> to vector<2x1x32xf32>
      %c0_33 = arith.constant 0 : index
      %c0_34 = arith.constant 0 : index
      %c0_35 = arith.constant 0 : index
      %50 = vector.load %arg8[%c0_33, %c0_34, %c0_35] : memref<2x1x32xf32, #tpu.memory_space<vmem>>, vector<2x1x32xf32>
      tpu.vector_store %arg8[%c0_33, %c0_34, %c0_35], %49 {strides = array<i32>} : memref<2x1x32xf32, #tpu.memory_space<vmem>>, vector<2x1x32xf32>,
      %cst_36 = arith.constant 0xFF800000 : f32
      %51 = vector.broadcast %cst_36 : f32 to vector<2x1xf32>
      %c0_37 = arith.constant 0 : index
      %c0_38 = arith.constant 0 : index
      %52 = vector.load %arg9[%c0_37, %c0_38] : memref<2x1xf32, #tpu.memory_space<vmem>>, vector<2x1xf32>
      tpu.vector_store %arg9[%c0_37, %c0_38], %51 {strides = array<i32>} : memref<2x1xf32, #tpu.memory_space<vmem>>, vector<2x1xf32>,
      %cst_39 = arith.constant 0.000000e+00 : f32
      %53 = vector.broadcast %cst_39 : f32 to vector<2x1xf32>
      %c0_40 = arith.constant 0 : index
      %c0_41 = arith.constant 0 : index
      %54 = vector.load %arg10[%c0_40, %c0_41] : memref<2x1xf32, #tpu.memory_space<vmem>>, vector<2x1xf32>
      tpu.vector_store %arg10[%c0_40, %c0_41], %53 {strides = array<i32>} : memref<2x1xf32, #tpu.memory_space<vmem>>, vector<2x1xf32>,
      %cst_42 = arith.constant 0.000000e+00 : f32
      %55 = vector.broadcast %cst_42 : f32 to vector<2x1x32xf32>
      %c0_43 = arith.constant 0 : index
      %c0_44 = arith.constant 0 : index
      %c0_45 = arith.constant 0 : index
      %56 = vector.load %arg11[%c0_43, %c0_44, %c0_45] : memref<2x1x32xf32, #tpu.memory_space<vmem>>, vector<2x1x32xf32>
      tpu.vector_store %arg11[%c0_43, %c0_44, %c0_45], %55 {strides = array<i32>} : memref<2x1x32xf32, #tpu.memory_space<vmem>>, vector<2x1x32xf32>,
    } else {
    }
    %c0_3 = arith.constant 0 : index
    %c0_4 = arith.constant 0 : index
    %c0_5 = arith.constant 0 : index
    %4 = vector.load %arg8[%c0_3, %c0_4, %c0_5] : memref<2x1x32xf32, #tpu.memory_space<vmem>>, vector<2x1x32xf32>
    "tpu.trace_start"() <{level = 10 : i32, message = "bqd,bkd->bqk"}> : () -> ()
    %cst = arith.constant dense<0.000000e+00> : vector<2x1x128xf32>
    %5 = tpu.matmul %4, %0, %cst {dimension_numbers = #tpu.dot_dimension_numbers<[2], [2], [1], [1], [0, 0, 0, 1, 1, 1], [0], [0]>} : vector<2x1x32xf32>, vector<2x128x32xf32>, vector<2x1x128xf32> -> vector<2x1x128xf32>
    "tpu.trace_stop"() : () -> ()
    %6 = vector.shape_cast %5 : vector<2x1x128xf32> to vector<2x128xf32>
    %c128_i32 = arith.constant 128 : i32
    %7 = arith.muli %arg1, %c128_i32 : i32
    %8 = tpu.iota {dimensions = array<i32: 1>} : vector<2x128xi32>
    %9 = vector.broadcast %7 : i32 to vector<2x128xi32>
    %10 = arith.addi %9, %8 : vector<2x128xi32>
    %c8_i32 = arith.constant 8 : i32
    %11 = vector.broadcast %c8_i32 : i32 to vector<2x128xi32>
    %12 = arith.cmpi slt, %10, %11 : vector<2x128xi32>
    %cst_6 = arith.constant 0xFF800000 : f32
    %13 = vector.broadcast %cst_6 : f32 to vector<2x128xf32>
    %14 = arith.select %12, %6, %13 : vector<2x128xi1>, vector<2x128xf32>
    %c128_i32_7 = arith.constant 128 : i32
    %15 = arith.muli %arg1, %c128_i32_7 : i32
    %16 = tpu.assume_multiple %15, 128 : i32
    %c0_8 = arith.constant 0 : index
    %17 = arith.index_cast %16 : i32 to index
    %18 = vector.load %arg12[%c0_8, %17] : memref<2x128xf32, #tpu.memory_space<vmem>>, vector<2x128xf32>
    tpu.vector_store %arg12[%c0_8, %17], %14 {strides = array<i32>} : memref<2x128xf32, #tpu.memory_space<vmem>>, vector<2x128xf32>,
    %c0_9 = arith.constant 0 : index
    %c0_10 = arith.constant 0 : index
    %19 = vector.load %arg9[%c0_9, %c0_10] : memref<2x1xf32, #tpu.memory_space<vmem>>, vector<2x1xf32>
    %cst_11 = arith.constant dense<0xFF800000> : vector<2xf32>
    %20 = vector.multi_reduction <maximumf>, %14, %cst_11 [1] : vector<2x128xf32> to vector<2xf32>
    %21 = vector.shape_cast %20 : vector<2xf32> to vector<2x1xf32>
    %22 = arith.maximumf %19, %21 : vector<2x1xf32>
    %23 = arith.subf %19, %22 : vector<2x1xf32>
    %24 = math.exp %23 : vector<2x1xf32>
    %25 = vector.broadcast %22 : vector<2x1xf32> to vector<2x128xf32>
    %26 = arith.subf %14, %25 : vector<2x128xf32>
    %27 = math.exp %26 : vector<2x128xf32>
    %c0_12 = arith.constant 0 : index
    %c0_13 = arith.constant 0 : index
    %28 = vector.load %arg10[%c0_12, %c0_13] : memref<2x1xf32, #tpu.memory_space<vmem>>, vector<2x1xf32>
    %29 = arith.mulf %24, %28 : vector<2x1xf32>
    %cst_14 = arith.constant dense<0.000000e+00> : vector<2xf32>
    %30 = vector.multi_reduction <add>, %27, %cst_14 [1] : vector<2x128xf32> to vector<2xf32>
    %31 = vector.shape_cast %30 : vector<2xf32> to vector<2x1xf32>
    %32 = arith.addf %29, %31 : vector<2x1xf32>
    %c0_15 = arith.constant 0 : index
    %c0_16 = arith.constant 0 : index
    %33 = vector.load %arg10[%c0_15, %c0_16] : memref<2x1xf32, #tpu.memory_space<vmem>>, vector<2x1xf32>
    tpu.vector_store %arg10[%c0_15, %c0_16], %32 {strides = array<i32>} : memref<2x1xf32, #tpu.memory_space<vmem>>, vector<2x1xf32>,
    %34 = vector.shape_cast %27 : vector<2x128xf32> to vector<2x1x128xf32>
    "tpu.trace_start"() <{level = 10 : i32, message = "bqk,bkd->bqd"}> : () -> ()
    %cst_17 = arith.constant dense<0.000000e+00> : vector<2x1x32xf32>
    %35 = tpu.matmul %34, %0, %cst_17 {dimension_numbers = #tpu.dot_dimension_numbers<[2], [1], [1], [2], [0, 0, 0, 1, 1, 2], [0], [0]>} : vector<2x1x128xf32>, vector<2x128x32xf32>, vector<2x1x32xf32> -> vector<2x1x32xf32>
    "tpu.trace_stop"() : () -> ()
    %36 = vector.shape_cast %24 : vector<2x1xf32> to vector<2x1x1xf32>
    %c0_18 = arith.constant 0 : index
    %c0_19 = arith.constant 0 : index
    %c0_20 = arith.constant 0 : index
    %37 = vector.load %arg11[%c0_18, %c0_19, %c0_20] : memref<2x1x32xf32, #tpu.memory_space<vmem>>, vector<2x1x32xf32>
    %38 = vector.broadcast %36 : vector<2x1x1xf32> to vector<2x1x32xf32>
    %39 = arith.mulf %38, %37 : vector<2x1x32xf32>
    %40 = arith.addf %39, %35 : vector<2x1x32xf32>
    %c0_21 = arith.constant 0 : index
    %c0_22 = arith.constant 0 : index
    %c0_23 = arith.constant 0 : index
    %41 = vector.load %arg11[%c0_21, %c0_22, %c0_23] : memref<2x1x32xf32, #tpu.memory_space<vmem>>, vector<2x1x32xf32>
    tpu.vector_store %arg11[%c0_21, %c0_22, %c0_23], %40 {strides = array<i32>} : memref<2x1x32xf32, #tpu.memory_space<vmem>>, vector<2x1x32xf32>,
    %c0_24 = arith.constant 0 : index
    %c0_25 = arith.constant 0 : index
    %42 = vector.load %arg9[%c0_24, %c0_25] : memref<2x1xf32, #tpu.memory_space<vmem>>, vector<2x1xf32>
    tpu.vector_store %arg9[%c0_24, %c0_25], %22 {strides = array<i32>} : memref<2x1xf32, #tpu.memory_space<vmem>>, vector<2x1xf32>,
    %c0_i32_26 = arith.constant 0 : i32
    %43 = arith.cmpi eq, %arg1, %c0_i32_26 : i32
    %44 = arith.extui %43 : i1 to i32
    %c0_i32_27 = arith.constant 0 : i32
    %45 = arith.cmpi ne, %44, %c0_i32_27 : i32
    scf.if %45 {
      %c0_28 = arith.constant 0 : index
      %c0_29 = arith.constant 0 : index
      %46 = vector.load %arg2[%c0_28, %c0_29] : memref<2x32xf32, #tpu.memory_space<vmem>>, vector<2x32xf32>
      %c0_30 = arith.constant 0 : index
      %c0_31 = arith.constant 0 : index
      %47 = vector.load %arg10[%c0_30, %c0_31] : memref<2x1xf32, #tpu.memory_space<vmem>>, vector<2x1xf32>
      %cst_32 = arith.constant 1.000000e+00 : f32
      %48 = vector.broadcast %cst_32 : f32 to vector<2x1xf32>
      %49 = arith.divf %48, %47 : vector<2x1xf32>
      %c0_33 = arith.constant 0 : index
      %c0_34 = arith.constant 0 : index
      %50 = vector.load %arg12[%c0_33, %c0_34] : memref<2x128xf32, #tpu.memory_space<vmem>>, vector<2x128xf32>
      %c0_35 = arith.constant 0 : index
      %c0_36 = arith.constant 0 : index
      %51 = vector.load %arg9[%c0_35, %c0_36] : memref<2x1xf32, #tpu.memory_space<vmem>>, vector<2x1xf32>
      %52 = vector.broadcast %51 : vector<2x1xf32> to vector<2x128xf32>
      %53 = arith.subf %50, %52 : vector<2x128xf32>
      %54 = math.exp %53 : vector<2x128xf32>
      %55 = vector.broadcast %49 : vector<2x1xf32> to vector<2x128xf32>
      %56 = arith.mulf %54, %55 : vector<2x128xf32>
      %c0_37 = arith.constant 0 : index
      %c0_38 = arith.constant 0 : index
      %57 = vector.load %arg7[%c0_37, %c0_38] : memref<2x128xf32, #tpu.memory_space<vmem>>, vector<2x128xf32>
      tpu.vector_store %arg7[%c0_37, %c0_38], %56 {strides = array<i32>} : memref<2x128xf32, #tpu.memory_space<vmem>>, vector<2x128xf32>,
      %c0_39 = arith.constant 0 : index
      %c0_40 = arith.constant 0 : index
      %c0_41 = arith.constant 0 : index
      %58 = vector.load %arg11[%c0_39, %c0_40, %c0_41] : memref<2x1x32xf32, #tpu.memory_space<vmem>>, vector<2x1x32xf32>
      %59 = vector.shape_cast %58 : vector<2x1x32xf32> to vector<2x32xf32>
      %60 = vector.broadcast %49 : vector<2x1xf32> to vector<2x32xf32>
      %61 = arith.mulf %59, %60 : vector<2x32xf32>
      %c0_42 = arith.constant 0 : index
      %c0_43 = arith.constant 0 : index
      %62 = vector.load %arg5[%c0_42, %c0_43] : memref<32x64xf32, #tpu.memory_space<vmem>>, vector<32x64xf32>
      %63 = vector.extract_strided_slice %62 {offsets = [0, 0], sizes = [32, 32], strides = [1, 1]} : vector<32x64xf32> to vector<32x32xf32>
      %cst_44 = arith.constant dense<0.000000e+00> : vector<2x32xf32>
      %64 = tpu.matmul %61, %63, %cst_44 {dimension_numbers = #tpu.dot_dimension_numbers<[1], [1], [0], [0], [0, 0, 1, 0], [], []>} : vector<2x32xf32>, vector<32x32xf32>, vector<2x32xf32> -> vector<2x32xf32>
      %65 = vector.extract_strided_slice %62 {offsets = [0, 32], sizes = [32, 32], strides = [1, 1]} : vector<32x64xf32> to vector<32x32xf32>
      %cst_45 = arith.constant dense<0.000000e+00> : vector<2x32xf32>
      %66 = tpu.matmul %46, %65, %cst_45 {dimension_numbers = #tpu.dot_dimension_numbers<[1], [1], [0], [0], [0, 0, 1, 0], [], []>} : vector<2x32xf32>, vector<32x32xf32>, vector<2x32xf32> -> vector<2x32xf32>
      %67 = arith.addf %64, %66 : vector<2x32xf32>
      %68 = math.tanh %67 : vector<2x32xf32>
      %c0_46 = arith.constant 0 : index
      %c0_47 = arith.constant 0 : index
      %69 = vector.load %arg6[%c0_46, %c0_47] : memref<2x32xf32, #tpu.memory_space<vmem>>, vector<2x32xf32>
      tpu.vector_store %arg6[%c0_46, %c0_47], %68 {strides = array<i32>} : memref<2x32xf32, #tpu.memory_space<vmem>>, vector<2x32xf32>,
    } else {
    }
    return
  }
  func.func @transform_0(%arg0: i32, %arg1: i32) -> (i32, i32) {
    %c0_i32 = arith.constant 0 : i32
    %c0_i32_0 = arith.constant 0 : i32
    return %arg0, %c0_i32 : i32, i32
  }
  func.func @transform_1(%arg0: i32, %arg1: i32) -> (i32, i32, i32) {
    %c0_i32 = arith.constant 0 : i32
    %c0_i32_0 = arith.constant 0 : i32
    return %arg0, %arg1, %c0_i32 : i32, i32, i32
  }
  func.func @transform_2(%arg0: i32, %arg1: i32) -> (i32, i32) {
    %c0_i32 = arith.constant 0 : i32
    %c0_i32_0 = arith.constant 0 : i32
    %c0_i32_1 = arith.constant 0 : i32
    return %c0_i32, %c0_i32_0 : i32, i32
  }
  func.func @transform_3(%arg0: i32, %arg1: i32) -> (i32, i32) {
    %c0_i32 = arith.constant 0 : i32
    %c0_i32_0 = arith.constant 0 : i32
    %c0_i32_1 = arith.constant 0 : i32
    return %c0_i32, %c0_i32_0 : i32, i32
  }
  func.func @transform_4(%arg0: i32, %arg1: i32) -> (i32, i32) {
    %c0_i32 = arith.constant 0 : i32
    %c0_i32_0 = arith.constant 0 : i32
    return %arg0, %c0_i32 : i32, i32
  }
  func.func @transform_5(%arg0: i32, %arg1: i32) -> (i32, i32) {
    %c0_i32 = arith.constant 0 : i32
    %c0_i32_0 = arith.constant 0 : i32
    return %arg0, %c0_i32 : i32, i32
  }
}

</mosaic_0001>

<llo_original>
// kernel: tpu_custom_call.1
$region0: #{tpu_custom_call.1}
  #allocation0 [shape = 'u32[]', space=smem, size = 0x4, offset = 0x4, fixed_abs, tag = 'smem constant byte address 0x4 - core index']
  #allocation1 [shape = 'u32[144,128]{1,0:T(1,128)}', space=vmem, size = 0x12000, scoped, tag = 'internal scratch']
  #allocation2 [shape = 'f32[2,1,32]{2,1,0:T(1,128)}', space=vmem, size = 0x400, scoped, tag = 'scratch operand']
  #allocation3 [shape = 'f32[2,1]{1,0:T(2,128)}', space=vmem, size = 0x400, scoped, tag = 'scratch operand']
  #allocation4 [shape = 'f32[2,1]{1,0:T(2,128)}', space=vmem, size = 0x400, scoped, tag = 'scratch operand']
  #allocation5 [shape = 'f32[2,1,32]{2,1,0:T(1,128)}', space=vmem, size = 0x400, scoped, tag = 'scratch operand']
  #allocation6 [shape = 'f32[2,128]{1,0:T(2,128)}', space=vmem, size = 0x400, scoped, tag = 'scratch operand']
  %s0 = inlined_call_operand.vmem [shape: f32[2,32], index: 0, kind: input, shape index: {}]
  %s1 = inlined_call_operand.vmem [shape: f32[2,128,32], index: 1, kind: input, shape index: {}]
  %s2 = inlined_call_operand.vmem [shape: f32[32,32], index: 2, kind: input, shape index: {}]
  %s3 = inlined_call_operand.vmem [shape: f32[32,64], index: 3, kind: input, shape index: {}]
  %s4 = inlined_call_operand.hbm [shape: f32[2,32], index: 4, kind: output, shape index: {0}]
  %s5 = inlined_call_operand.hbm [shape: f32[2,128], index: 5, kind: output, shape index: {1}]
  %6 = xla_tuple %s4, %s5
  %s7 = sld [smem:[#allocation0]]
  $region42: #{tpu_custom_call.1} parent=0
    _
  %s9 = ssub.s32 1, %s7
  %s10 = scalar_select 0, %s9, %s7
  $region1: #{tpu_custom_call.1} parent=0
    #allocation7 [shape = 'u8[1024]{0}', space=vmem, size = 0x400, scoped, tag = 'output window, operand 0, single buffered']
    #allocation8 [shape = 's32[1]{0}', space=sflag, size = 0x4, scoped, tag = 'scoped memory for tpu_custom_call.1']
    #allocation9 [shape = 'u8[1024]{0}', space=vmem, size = 0x400, scoped, tag = 'output window, operand 1, single buffered']
    #allocation10 [shape = 's32[1]{0}', space=sflag, size = 0x4, scoped, tag = 'scoped memory for tpu_custom_call.1']
    %11 = vsyncpa [#allocation8], 0
    %12 = vsyncpa [#allocation10], 0
    // Predicated region
    $region2: #{tpu_custom_call.1} parent=1 // pred_check
      _
    $region3: #{tpu_custom_call.1} parent=1 // pred_check_branch
      %14 = sbr.rel (0) target = $region5
    $region4: #{tpu_custom_call.1} parent=1 // pred_region
      _
    $region5: #{tpu_custom_call.1} parent=1 // pred_fallthru
      _
    // Predicated region
    $region6: #{tpu_custom_call.1} parent=1 // pred_check
      _
    $region7: #{tpu_custom_call.1} parent=1 // pred_check_branch
      %16 = sbr.rel (0) target = $region9
    $region8: #{tpu_custom_call.1} parent=1 // pred_region
      _
    $region9: #{tpu_custom_call.1} parent=1 // pred_fallthru
      _
    // Predicated region
    $region10: #{tpu_custom_call.1} parent=1 // pred_check
      _
    $region11: #{tpu_custom_call.1} parent=1 // pred_check_branch
      %18 = sbr.rel (0) target = $region13
    $region12: #{tpu_custom_call.1} parent=1 // pred_region
      _
    $region13: #{tpu_custom_call.1} parent=1 // pred_fallthru
      _
    // Predicated region
    $region14: #{tpu_custom_call.1} parent=1 // pred_check
      _
    $region15: #{tpu_custom_call.1} parent=1 // pred_check_branch
      %20 = sbr.rel (0) target = $region17
    $region16: #{tpu_custom_call.1} parent=1 // pred_region
      _
    $region17: #{tpu_custom_call.1} parent=1 // pred_fallthru
      _
    %v21 = vld [vmem:[%s1] sm:$0xff]
    %v22 = vld [vmem:[%s1 + $0x8] sm:$0xff]
    %v23 = vld [vmem:[%s1 + $0x10] sm:$0xff]
    %v24 = vld [vmem:[%s1 + $0x18] sm:$0xff]
    %v25 = vld [vmem:[%s1 + $0x20] sm:$0xff]
    %v26 = vld [vmem:[%s1 + $0x28] sm:$0xff]
    %v27 = vld [vmem:[%s1 + $0x30] sm:$0xff]
    %v28 = vld [vmem:[%s1 + $0x38] sm:$0xff]
    %v29 = vld [vmem:[%s1 + $0x40] sm:$0xff]
    %v30 = vld [vmem:[%s1 + $0x48] sm:$0xff]
    %v31 = vld [vmem:[%s1 + $0x50] sm:$0xff]
    %v32 = vld [vmem:[%s1 + $0x58] sm:$0xff]
    %v33 = vld [vmem:[%s1 + $0x60] sm:$0xff]
    %v34 = vld [vmem:[%s1 + $0x68] sm:$0xff]
    %v35 = vld [vmem:[%s1 + $0x70] sm:$0xff]
    %v36 = vld [vmem:[%s1 + $0x78] sm:$0xff]
    %v37 = vld [vmem:[%s1 + $0x80] sm:$0xff]
    %v38 = vld [vmem:[%s1 + $0x88] sm:$0xff]
    %v39 = vld [vmem:[%s1 + $0x90] sm:$0xff]
    %v40 = vld [vmem:[%s1 + $0x98] sm:$0xff]
    %v41 = vld [vmem:[%s1 + $0xa0] sm:$0xff]
    %v42 = vld [vmem:[%s1 + $0xa8] sm:$0xff]
    %v43 = vld [vmem:[%s1 + $0xb0] sm:$0xff]
    %v44 = vld [vmem:[%s1 + $0xb8] sm:$0xff]
    %v45 = vld [vmem:[%s1 + $0xc0] sm:$0xff]
    %v46 = vld [vmem:[%s1 + $0xc8] sm:$0xff]
    %v47 = vld [vmem:[%s1 + $0xd0] sm:$0xff]
    %v48 = vld [vmem:[%s1 + $0xd8] sm:$0xff]
    %v49 = vld [vmem:[%s1 + $0xe0] sm:$0xff]
    %v50 = vld [vmem:[%s1 + $0xe8] sm:$0xff]
    %v51 = vld [vmem:[%s1 + $0xf0] sm:$0xff]
    %v52 = vld [vmem:[%s1 + $0xf8] sm:$0xff]
    %p53 = scmp.eq.s32.totalorder 0, 0
    // Predicated region
    $region18: #{tpu_custom_call.1} parent=1 // pred_check
      %p54 = pneg %p53
    $region19: #{tpu_custom_call.1} parent=1 // pred_check_branch
      %56 = sbr.rel (%p54) target = $region21
    $region20: #{tpu_custom_call.1} parent=1 // pred_region
      %v57 = vld [vmem:[%s0] sm:$0x3]
      %v58 = vld [vmem:[%s2] sm:$0xff]
      %v59 = vld [vmem:[%s2 + $0x8] sm:$0xff]
      %v60 = vld [vmem:[%s2 + $0x10] sm:$0xff]
      %v61 = vld [vmem:[%s2 + $0x18] sm:$0xff]
      %vm62 = vcmask 261120
      %v64 = vsel %vm62, %v57, 0
      %v67 = vsel %vm62, %v58, 0
      %v70 = vsel %vm62, %v59, 0
      %v73 = vsel %vm62, %v60, 0
      %v76 = vsel %vm62, %v61, 0
      %78 = vmatprep.subr.mxu0 0.0
      %79 = vmatpush1.xpose.msra.mxu0 %v67
      %80 = vmatprep.subr.mxu0 0.0
      %81 = vmatpush1.xpose.msra.mxu0 %v70
      %82 = vmatprep.subr.mxu0 0.0
      %83 = vmatpush1.xpose.msra.mxu0 %v73
      %84 = vmatprep.subr.mxu0 0.0
      %85 = vmatpush1.xpose.msra.mxu0 %v76
      %86 = vmatprep.subr.mxu0 0.0
      %87 = vmatpush1.xpose.msra.mxu0 0.0
      %88 = vmatprep.subr.mxu0 0.0
      %89 = vmatpush1.xpose.msra.mxu0 0.0
      %90 = vmatprep.subr.mxu0 0.0
      %91 = vmatpush1.xpose.msra.mxu0 0.0
      %92 = vmatprep.subr.mxu0 0.0
      %93 = vmatpush1.xpose.msra.mxu0 0.0
      %94 = vmatprep.subr.mxu0 0.0
      %95 = vmatpush1.xpose.msra.mxu0 0.0
      %96 = vmatprep.subr.mxu0 0.0
      %97 = vmatpush1.xpose.msra.mxu0 0.0
      %98 = vmatprep.subr.mxu0 0.0
      %99 = vmatpush1.xpose.msra.mxu0 0.0
      %100 = vmatprep.subr.mxu0 0.0
      %101 = vmatpush1.xpose.msra.mxu0 0.0
      %102 = vmatprep.subr.mxu0 0.0
      %103 = vmatpush1.xpose.msra.mxu0 0.0
      %104 = vmatprep.subr.mxu0 0.0
      %105 = vmatpush1.xpose.msra.mxu0 0.0
      %106 = vmatprep.subr.mxu0 0.0
      %107 = vmatpush1.xpose.msra.mxu0 0.0
      %108 = vmatprep.subr.mxu0 0.0
      %109 = vmatpush1.xpose.msra.mxu0 0.0
      %110 = vmatprep.subr.mxu0 0.0
      %111 = vmatpush1.xpose.msra.mxu0 0.0
      %112 = vmatprep.subr.mxu0 0.0
      %113 = vmatpush1.xpose.msra.mxu0 0.0
      %114 = vmatprep.subr.mxu0 0.0
      %115 = vmatpush1.xpose.msra.mxu0 0.0
      %116 = vmatprep.subr.mxu0 0.0
      %117 = vmatpush1.xpose.msra.mxu0 0.0
      %118 = vmatprep.subr.mxu0 0.0
      %119 = vmatpush1.xpose.msra.mxu0 0.0
      %120 = vmatprep.subr.mxu0 0.0
      %121 = vmatpush1.xpose.msra.mxu0 0.0
      %122 = vmatprep.subr.mxu0 0.0
      %123 = vmatpush1.xpose.msra.mxu0 0.0
      %124 = vmatprep.subr.mxu0 0.0
      %125 = vmatpush1.xpose.msra.mxu0 0.0
      %126 = vmatprep.subr.mxu0 0.0
      %127 = vmatpush1.xpose.msra.mxu0 0.0
      %128 = vmatprep.subr.mxu0 0.0
      %129 = vmatpush1.xpose.msra.mxu0 0.0
      %130 = vmatprep.subr.mxu0 0.0
      %131 = vmatpush1.xpose.msra.mxu0 0.0
      %132 = vmatprep.subr.mxu0 0.0
      %133 = vmatpush1.xpose.msra.mxu0 0.0
      %134 = vmatprep.subr.mxu0 0.0
      %135 = vmatpush1.xpose.msra.mxu0 0.0
      %136 = vmatprep.subr.mxu0 0.0
      %137 = vmatpush1.xpose.msra.mxu0 0.0
      %138 = vmatprep.subr.mxu0 0.0
      %139 = vmatpush1.xpose.msra.mxu0 0.0
      %140 = vmatprep.subr.mxu0 0.0
      %141 = vmatpush1.xpose.msra.mxu0 0.0
      %142 = vmatprep.mubr.f32.mxu0 0.0
      %143 = vmatmul.mubr.f32.gmra.mrb[0].mxu0 %v64
      %v144 = vpop.f32.mrb[0].mxu0
      %v145 = vadd.f32 0.0, %v144
      %v146 = vpop.f32.mrb[0].mxu0
      %147 = vdwg.mxu0
      %v150 = vunpack.c.l.s4 1966171168
      %v151 = vunpack.c.0.s8 %v150
      %v152 = vlaneseq
      %v153 = vshrl.u32 %v152, 7
      %v154 = vsub.s32 %v151, %v153
      %v155 = vrot.slane %v145, %v154
      %v156 = vcombine.high %v155, %v155
      %v158 = vunpack.c.l.s4 1966171168
      %v159 = vunpack.c.0.s8 %v158
      %v160 = vlaneseq
      %v161 = vshrl.u32 %v160, 7
      %v162 = vsub.s32 %v159, %v161
      %v163 = vrot.slane %v155, %v162
      %v165 = vunpack.c.l.s4 1966171168
      %v166 = vunpack.c.0.s8 %v165
      %v167 = vlaneseq
      %v168 = vshrl.u32 %v167, 7
      %v169 = vsub.s32 %v166, %v168
      %v170 = vrot.slane %v156, %v169
      %vm173 = vcmask 253952
      %174 = vst.msk [vmem:[#allocation2] sm:$0x1] %vm173, %v163
      %175 = vst.msk [vmem:[#allocation2 + $0x1] sm:$0x1] %vm173, %v170
      %vm176 = vcmask 1024
      %177 = vst.msk [vmem:[#allocation3] sm:$0x3] %vm176, -inf
      %178 = vst.msk [vmem:[#allocation4] sm:$0x3] %vm176, 0.0
      %179 = vst.msk [vmem:[#allocation5] sm:$0x1] %vm173, 0.0
      %180 = vst.msk [vmem:[#allocation5 + $0x1] sm:$0x1] %vm173, 0.0
    $region21: #{tpu_custom_call.1} parent=1 // pred_fallthru
      _
    %v181 = vld [vmem:[#allocation2] sm:$0x1]
    %v182 = vld [vmem:[#allocation2 + $0x1] sm:$0x1]
    %vm183 = vcmask 261120
    %v185 = vsel %vm183, %v181, 0
    %v188 = vsel %vm183, %v21, 0
    %v191 = vsel %vm183, %v22, 0
    %v194 = vsel %vm183, %v23, 0
    %v197 = vsel %vm183, %v24, 0
    %v200 = vsel %vm183, %v25, 0
    %v203 = vsel %vm183, %v26, 0
    %v206 = vsel %vm183, %v27, 0
    %v209 = vsel %vm183, %v28, 0
    %v212 = vsel %vm183, %v29, 0
    %v215 = vsel %vm183, %v30, 0
    %v218 = vsel %vm183, %v31, 0
    %v221 = vsel %vm183, %v32, 0
    %v224 = vsel %vm183, %v33, 0
    %v227 = vsel %vm183, %v34, 0
    %v230 = vsel %vm183, %v35, 0
    %v233 = vsel %vm183, %v36, 0
    %235 = vmatprep.subr.mxu0 0.0
    %236 = vmatpush1.xpose.msra.mxu0 %v188
    %237 = vmatprep.subr.mxu0 0.0
    %238 = vmatpush1.xpose.msra.mxu0 %v191
    %239 = vmatprep.subr.mxu0 0.0
    %240 = vmatpush1.xpose.msra.mxu0 %v194
    %241 = vmatprep.subr.mxu0 0.0
    %242 = vmatpush1.xpose.msra.mxu0 %v197
    %243 = vmatprep.subr.mxu0 0.0
    %244 = vmatpush1.xpose.msra.mxu0 %v200
    %245 = vmatprep.subr.mxu0 0.0
    %246 = vmatpush1.xpose.msra.mxu0 %v203
    %247 = vmatprep.subr.mxu0 0.0
    %248 = vmatpush1.xpose.msra.mxu0 %v206
    %249 = vmatprep.subr.mxu0 0.0
    %250 = vmatpush1.xpose.msra.mxu0 %v209
    %251 = vmatprep.subr.mxu0 0.0
    %252 = vmatpush1.xpose.msra.mxu0 %v212
    %253 = vmatprep.subr.mxu0 0.0
    %254 = vmatpush1.xpose.msra.mxu0 %v215
    %255 = vmatprep.subr.mxu0 0.0
    %256 = vmatpush1.xpose.msra.mxu0 %v218
    %257 = vmatprep.subr.mxu0 0.0
    %258 = vmatpush1.xpose.msra.mxu0 %v221
    %259 = vmatprep.subr.mxu0 0.0
    %260 = vmatpush1.xpose.msra.mxu0 %v224
    %261 = vmatprep.subr.mxu0 0.0
    %262 = vmatpush1.xpose.msra.mxu0 %v227
    %263 = vmatprep.subr.mxu0 0.0
    %264 = vmatpush1.xpose.msra.mxu0 %v230
    %265 = vmatprep.subr.mxu0 0.0
    %266 = vmatpush1.xpose.msra.mxu0 %v233
    %267 = vmatprep.subr.mxu0 0.0
    %268 = vmatpush1.xpose.msra.mxu0 0.0
    %269 = vmatprep.subr.mxu0 0.0
    %270 = vmatpush1.xpose.msra.mxu0 0.0
    %271 = vmatprep.subr.mxu0 0.0
    %272 = vmatpush1.xpose.msra.mxu0 0.0
    %273 = vmatprep.subr.mxu0 0.0
    %274 = vmatpush1.xpose.msra.mxu0 0.0
    %275 = vmatprep.subr.mxu0 0.0
    %276 = vmatpush1.xpose.msra.mxu0 0.0
    %277 = vmatprep.subr.mxu0 0.0
    %278 = vmatpush1.xpose.msra.mxu0 0.0
    %279 = vmatprep.subr.mxu0 0.0
    %280 = vmatpush1.xpose.msra.mxu0 0.0
    %281 = vmatprep.subr.mxu0 0.0
    %282 = vmatpush1.xpose.msra.mxu0 0.0
    %283 = vmatprep.subr.mxu0 0.0
    %284 = vmatpush1.xpose.msra.mxu0 0.0
    %285 = vmatprep.subr.mxu0 0.0
    %286 = vmatpush1.xpose.msra.mxu0 0.0
    %287 = vmatprep.subr.mxu0 0.0
    %288 = vmatpush1.xpose.msra.mxu0 0.0
    %289 = vmatprep.subr.mxu0 0.0
    %290 = vmatpush1.xpose.msra.mxu0 0.0
    %291 = vmatprep.subr.mxu0 0.0
    %292 = vmatpush1.xpose.msra.mxu0 0.0
    %293 = vmatprep.subr.mxu0 0.0
    %294 = vmatpush1.xpose.msra.mxu0 0.0
    %295 = vmatprep.subr.mxu0 0.0
    %296 = vmatpush1.xpose.msra.mxu0 0.0
    %297 = vmatprep.subr.mxu0 0.0
    %298 = vmatpush1.xpose.msra.mxu0 0.0
    %299 = vmatprep.mubr.f32.mxu0 0.0
    %300 = vmatmul.mubr.f32.gmra.mrb[0].mxu0 %v185
    %v301 = vpop.f32.mrb[0].mxu0
    %v302 = vadd.f32 0.0, %v301
    %v303 = vpop.f32.mrb[0].mxu0
    %304 = vdwg.mxu0
    %v306 = vsel %vm183, %v182, 0
    %v309 = vsel %vm183, %v37, 0
    %v312 = vsel %vm183, %v38, 0
    %v315 = vsel %vm183, %v39, 0
    %v318 = vsel %vm183, %v40, 0
    %v321 = vsel %vm183, %v41, 0
    %v324 = vsel %vm183, %v42, 0
    %v327 = vsel %vm183, %v43, 0
    %v330 = vsel %vm183, %v44, 0
    %v333 = vsel %vm183, %v45, 0
    %v336 = vsel %vm183, %v46, 0
    %v339 = vsel %vm183, %v47, 0
    %v342 = vsel %vm183, %v48, 0
    %v345 = vsel %vm183, %v49, 0
    %v348 = vsel %vm183, %v50, 0
    %v351 = vsel %vm183, %v51, 0
    %v354 = vsel %vm183, %v52, 0
    %356 = vmatprep.subr.mxu0 0.0
    %357 = vmatpush1.xpose.msra.mxu0 %v309
    %358 = vmatprep.subr.mxu0 0.0
    %359 = vmatpush1.xpose.msra.mxu0 %v312
    %360 = vmatprep.subr.mxu0 0.0
    %361 = vmatpush1.xpose.msra.mxu0 %v315
    %362 = vmatprep.subr.mxu0 0.0
    %363 = vmatpush1.xpose.msra.mxu0 %v318
    %364 = vmatprep.subr.mxu0 0.0
    %365 = vmatpush1.xpose.msra.mxu0 %v321
    %366 = vmatprep.subr.mxu0 0.0
    %367 = vmatpush1.xpose.msra.mxu0 %v324
    %368 = vmatprep.subr.mxu0 0.0
    %369 = vmatpush1.xpose.msra.mxu0 %v327
    %370 = vmatprep.subr.mxu0 0.0
    %371 = vmatpush1.xpose.msra.mxu0 %v330
    %372 = vmatprep.subr.mxu0 0.0
    %373 = vmatpush1.xpose.msra.mxu0 %v333
    %374 = vmatprep.subr.mxu0 0.0
    %375 = vmatpush1.xpose.msra.mxu0 %v336
    %376 = vmatprep.subr.mxu0 0.0
    %377 = vmatpush1.xpose.msra.mxu0 %v339
    %378 = vmatprep.subr.mxu0 0.0
    %379 = vmatpush1.xpose.msra.mxu0 %v342
    %380 = vmatprep.subr.mxu0 0.0
    %381 = vmatpush1.xpose.msra.mxu0 %v345
    %382 = vmatprep.subr.mxu0 0.0
    %383 = vmatpush1.xpose.msra.mxu0 %v348
    %384 = vmatprep.subr.mxu0 0.0
    %385 = vmatpush1.xpose.msra.mxu0 %v351
    %386 = vmatprep.subr.mxu0 0.0
    %387 = vmatpush1.xpose.msra.mxu0 %v354
    %388 = vmatprep.subr.mxu0 0.0
    %389 = vmatpush1.xpose.msra.mxu0 0.0
    %390 = vmatprep.subr.mxu0 0.0
    %391 = vmatpush1.xpose.msra.mxu0 0.0
    %392 = vmatprep.subr.mxu0 0.0
    %393 = vmatpush1.xpose.msra.mxu0 0.0
    %394 = vmatprep.subr.mxu0 0.0
    %395 = vmatpush1.xpose.msra.mxu0 0.0
    %396 = vmatprep.subr.mxu0 0.0
    %397 = vmatpush1.xpose.msra.mxu0 0.0
    %398 = vmatprep.subr.mxu0 0.0
    %399 = vmatpush1.xpose.msra.mxu0 0.0
    %400 = vmatprep.subr.mxu0 0.0
    %401 = vmatpush1.xpose.msra.mxu0 0.0
    %402 = vmatprep.subr.mxu0 0.0
    %403 = vmatpush1.xpose.msra.mxu0 0.0
    %404 = vmatprep.subr.mxu0 0.0
    %405 = vmatpush1.xpose.msra.mxu0 0.0
    %406 = vmatprep.subr.mxu0 0.0
    %407 = vmatpush1.xpose.msra.mxu0 0.0
    %408 = vmatprep.subr.mxu0 0.0
    %409 = vmatpush1.xpose.msra.mxu0 0.0
    %410 = vmatprep.subr.mxu0 0.0
    %411 = vmatpush1.xpose.msra.mxu0 0.0
    %412 = vmatprep.subr.mxu0 0.0
    %413 = vmatpush1.xpose.msra.mxu0 0.0
    %414 = vmatprep.subr.mxu0 0.0
    %415 = vmatpush1.xpose.msra.mxu0 0.0
    %416 = vmatprep.subr.mxu0 0.0
    %417 = vmatpush1.xpose.msra.mxu0 0.0
    %418 = vmatprep.subr.mxu0 0.0
    %419 = vmatpush1.xpose.msra.mxu0 0.0
    %420 = vmatprep.mubr.f32.mxu0 0.0
    %421 = vmatmul.mubr.f32.gmra.mrb[0].mxu0 %v306
    %v422 = vpop.f32.mrb[0].mxu0
    %v423 = vadd.f32 0.0, %v422
    %v424 = vpop.f32.mrb[0].mxu0
    %425 = vdwg.mxu0
    %s426 = smul.u32 0, 128
    %v427 = vlaneseq
    %v428 = vand.u32 %v427, 127
    %v429 = vstv %s426
    %v430 = vadd.s32 %v429, %v428
    %vm431 = vcmp.lt.s32.totalorder %v430, 8
    %v434 = vrot.slane %v423, 7
    %vm435 = vcmask 1041409
    %v436 = vsel %vm435, %v434, %v302
    %v438 = vsel %vm431, %v436, -inf
    %s439 = sshra.s32 %s426, 7
    %s440 = sand.u32 %s426, 127
    %s441 = scalar_lea.vmem [#allocation6], %s439
    %442 = vst [vmem:[%s441] sm:$0x3] %v438
    %v443 = vld [vmem:[#allocation3] sm:$0x3]
    %vm444 = vcmask 1041408
    %v445 = vsel %vm444, %v438, -inf
    %446 = vmax.xlane.f32.xlu0 %v445
    %v447 = vpop.xlane.xlu0 %446
    %v448 = vmax.f32 %v443, %v447
    %v449 = vsub.f32 %v443, %v448
    %v450 = vmul.f32 %v449, 1.442695
    %v451 = vpow.pop %v450
    %453 = vset.pattern.permute.xlu0 0
    %454 = vperm.xlu0 %453, %v448
    %v455 = vpop.permute.xlu0 %454
    %v457 = vsub.f32 %v438, %v455
    %v458 = vmul.f32 %v457, 1.442695
    %v459 = vpow.pop %v458
    %v460 = vld [vmem:[#allocation4] sm:$0x3]
    %v461 = vmul.f32 %v451, %v460
    %v462 = vsel %vm444, %v459, 0.0
    %463 = vadd.xlane.f32.xlu0 %v462
    %v464 = vpop.xlane.xlu0 %463
    %v465 = vadd.f32 %v461, %v464
    %vm466 = vcmask 1024
    %467 = vst.msk [vmem:[#allocation4] sm:$0x3] %vm466, %v465
    %v470 = vunpack.c.l.s4 1966171168
    %v471 = vunpack.c.0.s8 %v470
    %v472 = vlaneseq
    %v473 = vshrl.u32 %v472, 7
    %v474 = vsub.s32 %v471, %v473
    %v475 = vrot.slane %v459, %v474
    %v476 = vcombine.high %v475, %v475
    %v478 = vunpack.c.l.s4 1966171168
    %v479 = vunpack.c.0.s8 %v478
    %v480 = vlaneseq
    %v481 = vshrl.u32 %v480, 7
    %v482 = vsub.s32 %v479, %v481
    %v483 = vrot.slane %v475, %v482
    %v485 = vunpack.c.l.s4 1966171168
    %v486 = vunpack.c.0.s8 %v485
    %v487 = vlaneseq
    %v488 = vshrl.u32 %v487, 7
    %v489 = vsub.s32 %v486, %v488
    %v490 = vrot.slane %v476, %v489
    %493 = vmatprep.subr.mxu0 0.0
    %494 = vmatpush1.msra.mxu0 %v21
    %495 = vmatprep.subr.mxu0 0.0
    %496 = vmatpush1.msra.mxu0 %v22
    %497 = vmatprep.subr.mxu0 0.0
    %498 = vmatpush1.msra.mxu0 %v23
    %499 = vmatprep.subr.mxu0 0.0
    %500 = vmatpush1.msra.mxu0 %v24
    %501 = vmatprep.subr.mxu0 0.0
    %502 = vmatpush1.msra.mxu0 %v25
    %503 = vmatprep.subr.mxu0 0.0
    %504 = vmatpush1.msra.mxu0 %v26
    %505 = vmatprep.subr.mxu0 0.0
    %506 = vmatpush1.msra.mxu0 %v27
    %507 = vmatprep.subr.mxu0 0.0
    %508 = vmatpush1.msra.mxu0 %v28
    %509 = vmatprep.subr.mxu0 0.0
    %510 = vmatpush1.msra.mxu0 %v29
    %511 = vmatprep.subr.mxu0 0.0
    %512 = vmatpush1.msra.mxu0 %v30
    %513 = vmatprep.subr.mxu0 0.0
    %514 = vmatpush1.msra.mxu0 %v31
    %515 = vmatprep.subr.mxu0 0.0
    %516 = vmatpush1.msra.mxu0 %v32
    %517 = vmatprep.subr.mxu0 0.0
    %518 = vmatpush1.msra.mxu0 %v33
    %519 = vmatprep.subr.mxu0 0.0
    %520 = vmatpush1.msra.mxu0 %v34
    %521 = vmatprep.subr.mxu0 0.0
    %522 = vmatpush1.msra.mxu0 %v35
    %523 = vmatprep.subr.mxu0 0.0
    %524 = vmatpush1.msra.mxu0 %v36
    %525 = vmatprep.subr.mxu0 0.0
    %526 = vmatpush1.msra.mxu0 0.0
    %527 = vmatprep.subr.mxu0 0.0
    %528 = vmatpush1.msra.mxu0 0.0
    %529 = vmatprep.subr.mxu0 0.0
    %530 = vmatpush1.msra.mxu0 0.0
    %531 = vmatprep.subr.mxu0 0.0
    %532 = vmatpush1.msra.mxu0 0.0
    %533 = vmatprep.subr.mxu0 0.0
    %534 = vmatpush1.msra.mxu0 0.0
    %535 = vmatprep.subr.mxu0 0.0
    %536 = vmatpush1.msra.mxu0 0.0
    %537 = vmatprep.subr.mxu0 0.0
    %538 = vmatpush1.msra.mxu0 0.0
    %539 = vmatprep.subr.mxu0 0.0
    %540 = vmatpush1.msra.mxu0 0.0
    %541 = vmatprep.subr.mxu0 0.0
    %542 = vmatpush1.msra.mxu0 0.0
    %543 = vmatprep.subr.mxu0 0.0
    %544 = vmatpush1.msra.mxu0 0.0
    %545 = vmatprep.subr.mxu0 0.0
    %546 = vmatpush1.msra.mxu0 0.0
    %547 = vmatprep.subr.mxu0 0.0
    %548 = vmatpush1.msra.mxu0 0.0
    %549 = vmatprep.subr.mxu0 0.0
    %550 = vmatpush1.msra.mxu0 0.0
    %551 = vmatprep.subr.mxu0 0.0
    %552 = vmatpush1.msra.mxu0 0.0
    %553 = vmatprep.subr.mxu0 0.0
    %554 = vmatpush1.msra.mxu0 0.0
    %555 = vmatprep.subr.mxu0 0.0
    %556 = vmatpush1.msra.mxu0 0.0
    %557 = vmatprep.mubr.f32.mxu0 0.0
    %558 = vmatmul.mubr.f32.gmra.mrb[0].mxu0 %v483
    %v559 = vpop.f32.mrb[0].mxu0
    %v560 = vadd.f32 0.0, %v559
    %v561 = vpop.f32.mrb[0].mxu0
    %562 = vdwg.mxu0
    %563 = vmatprep.subr.mxu0 0.0
    %564 = vmatpush1.msra.mxu0 %v37
    %565 = vmatprep.subr.mxu0 0.0
    %566 = vmatpush1.msra.mxu0 %v38
    %567 = vmatprep.subr.mxu0 0.0
    %568 = vmatpush1.msra.mxu0 %v39
    %569 = vmatprep.subr.mxu0 0.0
    %570 = vmatpush1.msra.mxu0 %v40
    %571 = vmatprep.subr.mxu0 0.0
    %572 = vmatpush1.msra.mxu0 %v41
    %573 = vmatprep.subr.mxu0 0.0
    %574 = vmatpush1.msra.mxu0 %v42
    %575 = vmatprep.subr.mxu0 0.0
    %576 = vmatpush1.msra.mxu0 %v43
    %577 = vmatprep.subr.mxu0 0.0
    %578 = vmatpush1.msra.mxu0 %v44
    %579 = vmatprep.subr.mxu0 0.0
    %580 = vmatpush1.msra.mxu0 %v45
    %581 = vmatprep.subr.mxu0 0.0
    %582 = vmatpush1.msra.mxu0 %v46
    %583 = vmatprep.subr.mxu0 0.0
    %584 = vmatpush1.msra.mxu0 %v47
    %585 = vmatprep.subr.mxu0 0.0
    %586 = vmatpush1.msra.mxu0 %v48
    %587 = vmatprep.subr.mxu0 0.0
    %588 = vmatpush1.msra.mxu0 %v49
    %589 = vmatprep.subr.mxu0 0.0
    %590 = vmatpush1.msra.mxu0 %v50
    %591 = vmatprep.subr.mxu0 0.0
    %592 = vmatpush1.msra.mxu0 %v51
    %593 = vmatprep.subr.mxu0 0.0
    %594 = vmatpush1.msra.mxu0 %v52
    %595 = vmatprep.subr.mxu0 0.0
    %596 = vmatpush1.msra.mxu0 0.0
    %597 = vmatprep.subr.mxu0 0.0
    %598 = vmatpush1.msra.mxu0 0.0
    %599 = vmatprep.subr.mxu0 0.0
    %600 = vmatpush1.msra.mxu0 0.0
    %601 = vmatprep.subr.mxu0 0.0
    %602 = vmatpush1.msra.mxu0 0.0
    %603 = vmatprep.subr.mxu0 0.0
    %604 = vmatpush1.msra.mxu0 0.0
    %605 = vmatprep.subr.mxu0 0.0
    %606 = vmatpush1.msra.mxu0 0.0
    %607 = vmatprep.subr.mxu0 0.0
    %608 = vmatpush1.msra.mxu0 0.0
    %609 = vmatprep.subr.mxu0 0.0
    %610 = vmatpush1.msra.mxu0 0.0
    %611 = vmatprep.subr.mxu0 0.0
    %612 = vmatpush1.msra.mxu0 0.0
    %613 = vmatprep.subr.mxu0 0.0
    %614 = vmatpush1.msra.mxu0 0.0
    %615 = vmatprep.subr.mxu0 0.0
    %616 = vmatpush1.msra.mxu0 0.0
    %617 = vmatprep.subr.mxu0 0.0
    %618 = vmatpush1.msra.mxu0 0.0
    %619 = vmatprep.subr.mxu0 0.0
    %620 = vmatpush1.msra.mxu0 0.0
    %621 = vmatprep.subr.mxu0 0.0
    %622 = vmatpush1.msra.mxu0 0.0
    %623 = vmatprep.subr.mxu0 0.0
    %624 = vmatpush1.msra.mxu0 0.0
    %625 = vmatprep.subr.mxu0 0.0
    %626 = vmatpush1.msra.mxu0 0.0
    %627 = vmatprep.mubr.f32.mxu0 0.0
    %628 = vmatmul.mubr.f32.gmra.mrb[0].mxu0 %v490
    %v629 = vpop.f32.mrb[0].mxu0
    %v630 = vadd.f32 0.0, %v629
    %v631 = vpop.f32.mrb[0].mxu0
    %632 = vdwg.mxu0
    %v635 = vunpack.c.l.s4 1966171168
    %v636 = vunpack.c.0.s8 %v635
    %v637 = vlaneseq
    %v638 = vshrl.u32 %v637, 7
    %v639 = vsub.s32 %v636, %v638
    %v640 = vrot.slane %v451, %v639
    %v641 = vcombine.high %v640, %v640
    %v643 = vunpack.c.l.s4 1966171168
    %v644 = vunpack.c.0.s8 %v643
    %v645 = vlaneseq
    %v646 = vshrl.u32 %v645, 7
    %v647 = vsub.s32 %v644, %v646
    %v648 = vrot.slane %v640, %v647
    %v650 = vunpack.c.l.s4 1966171168
    %v651 = vunpack.c.0.s8 %v650
    %v652 = vlaneseq
    %v653 = vshrl.u32 %v652, 7
    %v654 = vsub.s32 %v651, %v653
    %v655 = vrot.slane %v641, %v654
    %v656 = vld [vmem:[#allocation5] sm:$0x1]
    %v657 = vld [vmem:[#allocation5 + $0x1] sm:$0x1]
    %658 = vset.pattern.permute.xlu0 0
    %659 = vperm.xlu0 %658, %v648
    %v660 = vpop.permute.xlu0 %659
    %v662 = vlaneseq
    %v663 = vshrl.u32 %v662, 7
    %v664 = vsub.s32 0, %v663
    %v665 = vrot.slane %v660, %v664
    %666 = vset.pattern.permute.xlu0 0
    %667 = vperm.xlu0 %666, %v655
    %v668 = vpop.permute.xlu0 %667
    %v670 = vlaneseq
    %v671 = vshrl.u32 %v670, 7
    %v672 = vsub.s32 0, %v671
    %v673 = vrot.slane %v668, %v672
    %v674 = vmul.f32 %v665, %v656
    %v675 = vmul.f32 %v673, %v657
    %v676 = vadd.f32 %v674, %v560
    %v677 = vadd.f32 %v675, %v630
    %vm678 = vcmask 253952
    %679 = vst.msk [vmem:[#allocation5] sm:$0x1] %vm678, %v676
    %680 = vst.msk [vmem:[#allocation5 + $0x1] sm:$0x1] %vm678, %v677
    %681 = vst.msk [vmem:[#allocation3] sm:$0x3] %vm466, %v448
    // Predicated region
    $region22: #{tpu_custom_call.1} parent=1 // pred_check
      %p682 = pneg %p53
    $region23: #{tpu_custom_call.1} parent=1 // pred_check_branch
      %684 = sbr.rel (%p682) target = $region25
    $region24: #{tpu_custom_call.1} parent=1 // pred_region
      %v685 = vld [vmem:[%s0] sm:$0x3]
      %v686 = vld [vmem:[#allocation4] sm:$0x3]
      %v687 = vrcp.pop %v686
      %v688 = vmul.f32 1.0, %v687
      %v689 = vld [vmem:[#allocation6] sm:$0x3]
      %v690 = vld [vmem:[#allocation3] sm:$0x3]
      %692 = vset.pattern.permute.xlu0 0
      %693 = vperm.xlu0 %692, %v690
      %v694 = vpop.permute.xlu0 %693
      %v696 = vsub.f32 %v689, %v694
      %v697 = vmul.f32 %v696, 1.442695
      %v698 = vpow.pop %v697
      %700 = vset.pattern.permute.xlu0 0
      %701 = vperm.xlu0 %700, %v688
      %v702 = vpop.permute.xlu0 %701
      %v704 = vmul.f32 %v698, %v702
      %705 = vst [vmem:[#allocation9] sm:$0x3] %v704
      %v706 = vld [vmem:[#allocation5] sm:$0x1]
      %v707 = vld [vmem:[#allocation5 + $0x1] sm:$0x1]
      %v708 = vlaneseq
      %v709 = vshrl.u32 %v708, 7
      %v710 = vsub.s32 0, %v709
      %v711 = vrot.slane %v702, %v710
      %v712 = vlaneseq
      %v713 = vshrl.u32 %v712, 7
      %v714 = vsub.s32 1, %v713
      %v715 = vrot.slane %v702, %v714
      %v718 = vmul.f32 %v706, %v711
      %v719 = vmul.f32 %v707, %v715
      %v720 = vld [vmem:[%s3] sm:$0xff]
      %v721 = vld [vmem:[%s3 + $0x8] sm:$0xff]
      %v722 = vld [vmem:[%s3 + $0x10] sm:$0xff]
      %v723 = vld [vmem:[%s3 + $0x18] sm:$0xff]
      %728 = vrot.lane.b32.xlu0 %v720, 96
      %v729 = vpop.permute.xlu0 %728
      %730 = vrot.lane.b32.xlu0 %v721, 96
      %v731 = vpop.permute.xlu0 %730
      %732 = vrot.lane.b32.xlu0 %v722, 96
      %v733 = vpop.permute.xlu0 %732
      %734 = vrot.lane.b32.xlu0 %v723, 96
      %v735 = vpop.permute.xlu0 %734
      %v737 = vsel %vm183, %v685, 0
      %v739 = vsel %vm183, %v729, 0
      %v741 = vsel %vm183, %v731, 0
      %v743 = vsel %vm183, %v733, 0
      %v745 = vsel %vm183, %v735, 0
      %747 = vmatprep.subr.mxu0 0.0
      %748 = vmatpush1.xpose.msra.mxu0 %v739
      %749 = vmatprep.subr.mxu0 0.0
      %750 = vmatpush1.xpose.msra.mxu0 %v741
      %751 = vmatprep.subr.mxu0 0.0
      %752 = vmatpush1.xpose.msra.mxu0 %v743
      %753 = vmatprep.subr.mxu0 0.0
      %754 = vmatpush1.xpose.msra.mxu0 %v745
      %755 = vmatprep.subr.mxu0 0.0
      %756 = vmatpush1.xpose.msra.mxu0 0.0
      %757 = vmatprep.subr.mxu0 0.0
      %758 = vmatpush1.xpose.msra.mxu0 0.0
      %759 = vmatprep.subr.mxu0 0.0
      %760 = vmatpush1.xpose.msra.mxu0 0.0
      %761 = vmatprep.subr.mxu0 0.0
      %762 = vmatpush1.xpose.msra.mxu0 0.0
      %763 = vmatprep.subr.mxu0 0.0
      %764 = vmatpush1.xpose.msra.mxu0 0.0
      %765 = vmatprep.subr.mxu0 0.0
      %766 = vmatpush1.xpose.msra.mxu0 0.0
      %767 = vmatprep.subr.mxu0 0.0
      %768 = vmatpush1.xpose.msra.mxu0 0.0
      %769 = vmatprep.subr.mxu0 0.0
      %770 = vmatpush1.xpose.msra.mxu0 0.0
      %771 = vmatprep.subr.mxu0 0.0
      %772 = vmatpush1.xpose.msra.mxu0 0.0
      %773 = vmatprep.subr.mxu0 0.0
      %774 = vmatpush1.xpose.msra.mxu0 0.0
      %775 = vmatprep.subr.mxu0 0.0
      %776 = vmatpush1.xpose.msra.mxu0 0.0
      %777 = vmatprep.subr.mxu0 0.0
      %778 = vmatpush1.xpose.msra.mxu0 0.0
      %779 = vmatprep.subr.mxu0 0.0
      %780 = vmatpush1.xpose.msra.mxu0 0.0
      %781 = vmatprep.subr.mxu0 0.0
      %782 = vmatpush1.xpose.msra.mxu0 0.0
      %783 = vmatprep.subr.mxu0 0.0
      %784 = vmatpush1.xpose.msra.mxu0 0.0
      %785 = vmatprep.subr.mxu0 0.0
      %786 = vmatpush1.xpose.msra.mxu0 0.0
      %787 = vmatprep.subr.mxu0 0.0
      %788 = vmatpush1.xpose.msra.mxu0 0.0
      %789 = vmatprep.subr.mxu0 0.0
      %790 = vmatpush1.xpose.msra.mxu0 0.0
      %791 = vmatprep.subr.mxu0 0.0
      %792 = vmatpush1.xpose.msra.mxu0 0.0
      %793 = vmatprep.subr.mxu0 0.0
      %794 = vmatpush1.xpose.msra.mxu0 0.0
      %795 = vmatprep.subr.mxu0 0.0
      %796 = vmatpush1.xpose.msra.mxu0 0.0
      %797 = vmatprep.subr.mxu0 0.0
      %798 = vmatpush1.xpose.msra.mxu0 0.0
      %799 = vmatprep.subr.mxu0 0.0
      %800 = vmatpush1.xpose.msra.mxu0 0.0
      %801 = vmatprep.subr.mxu0 0.0
      %802 = vmatpush1.xpose.msra.mxu0 0.0
      %803 = vmatprep.subr.mxu0 0.0
      %804 = vmatpush1.xpose.msra.mxu0 0.0
      %805 = vmatprep.subr.mxu0 0.0
      %806 = vmatpush1.xpose.msra.mxu0 0.0
      %807 = vmatprep.subr.mxu0 0.0
      %808 = vmatpush1.xpose.msra.mxu0 0.0
      %809 = vmatprep.subr.mxu0 0.0
      %810 = vmatpush1.xpose.msra.mxu0 0.0
      %811 = vmatprep.mubr.f32.mxu0 0.0
      %812 = vmatmul.mubr.f32.gmra.mrb[0].mxu0 %v737
      %v813 = vpop.f32.mrb[0].mxu0
      %v814 = vadd.f32 0.0, %v813
      %v815 = vpop.f32.mrb[0].mxu0
      %816 = vdwg.mxu0
      %v819 = vcombine.low %v718, %v719
      %v821 = vunpack.c.l.s4 1966171168
      %v822 = vunpack.c.0.s8 %v821
      %v823 = vlaneseq
      %v824 = vshrl.u32 %v823, 7
      %v825 = vsub.s32 %v822, %v824
      %v826 = vrot.slane %v819, %v825
      %v828 = vunpack.c.l.s4 1966171168
      %v829 = vunpack.c.0.s8 %v828
      %v830 = vlaneseq
      %v831 = vshrl.u32 %v830, 7
      %v832 = vsub.s32 %v829, %v831
      %v833 = vrot.slane %v826, %v832
      %v834 = vsel %vm183, %v833, 0
      %v836 = vsel %vm183, %v720, 0
      %v838 = vsel %vm183, %v721, 0
      %v840 = vsel %vm183, %v722, 0
      %v842 = vsel %vm183, %v723, 0
      %844 = vmatprep.subr.mxu0 0.0
      %845 = vmatpush1.xpose.msra.mxu0 %v836
      %846 = vmatprep.subr.mxu0 0.0
      %847 = vmatpush1.xpose.msra.mxu0 %v838
      %848 = vmatprep.subr.mxu0 0.0
      %849 = vmatpush1.xpose.msra.mxu0 %v840
      %850 = vmatprep.subr.mxu0 0.0
      %851 = vmatpush1.xpose.msra.mxu0 %v842
      %852 = vmatprep.subr.mxu0 0.0
      %853 = vmatpush1.xpose.msra.mxu0 0.0
      %854 = vmatprep.subr.mxu0 0.0
      %855 = vmatpush1.xpose.msra.mxu0 0.0
      %856 = vmatprep.subr.mxu0 0.0
      %857 = vmatpush1.xpose.msra.mxu0 0.0
      %858 = vmatprep.subr.mxu0 0.0
      %859 = vmatpush1.xpose.msra.mxu0 0.0
      %860 = vmatprep.subr.mxu0 0.0
      %861 = vmatpush1.xpose.msra.mxu0 0.0
      %862 = vmatprep.subr.mxu0 0.0
      %863 = vmatpush1.xpose.msra.mxu0 0.0
      %864 = vmatprep.subr.mxu0 0.0
      %865 = vmatpush1.xpose.msra.mxu0 0.0
      %866 = vmatprep.subr.mxu0 0.0
      %867 = vmatpush1.xpose.msra.mxu0 0.0
      %868 = vmatprep.subr.mxu0 0.0
      %869 = vmatpush1.xpose.msra.mxu0 0.0
      %870 = vmatprep.subr.mxu0 0.0
      %871 = vmatpush1.xpose.msra.mxu0 0.0
      %872 = vmatprep.subr.mxu0 0.0
      %873 = vmatpush1.xpose.msra.mxu0 0.0
      %874 = vmatprep.subr.mxu0 0.0
      %875 = vmatpush1.xpose.msra.mxu0 0.0
      %876 = vmatprep.subr.mxu0 0.0
      %877 = vmatpush1.xpose.msra.mxu0 0.0
      %878 = vmatprep.subr.mxu0 0.0
      %879 = vmatpush1.xpose.msra.mxu0 0.0
      %880 = vmatprep.subr.mxu0 0.0
      %881 = vmatpush1.xpose.msra.mxu0 0.0
      %882 = vmatprep.subr.mxu0 0.0
      %883 = vmatpush1.xpose.msra.mxu0 0.0
      %884 = vmatprep.subr.mxu0 0.0
      %885 = vmatpush1.xpose.msra.mxu0 0.0
      %886 = vmatprep.subr.mxu0 0.0
      %887 = vmatpush1.xpose.msra.mxu0 0.0
      %888 = vmatprep.subr.mxu0 0.0
      %889 = vmatpush1.xpose.msra.mxu0 0.0
      %890 = vmatprep.subr.mxu0 0.0
      %891 = vmatpush1.xpose.msra.mxu0 0.0
      %892 = vmatprep.subr.mxu0 0.0
      %893 = vmatpush1.xpose.msra.mxu0 0.0
      %894 = vmatprep.subr.mxu0 0.0
      %895 = vmatpush1.xpose.msra.mxu0 0.0
      %896 = vmatprep.subr.mxu0 0.0
      %897 = vmatpush1.xpose.msra.mxu0 0.0
      %898 = vmatprep.subr.mxu0 0.0
      %899 = vmatpush1.xpose.msra.mxu0 0.0
      %900 = vmatprep.subr.mxu0 0.0
      %901 = vmatpush1.xpose.msra.mxu0 0.0
      %902 = vmatprep.subr.mxu0 0.0
      %903 = vmatpush1.xpose.msra.mxu0 0.0
      %904 = vmatprep.subr.mxu0 0.0
      %905 = vmatpush1.xpose.msra.mxu0 0.0
      %906 = vmatprep.subr.mxu0 0.0
      %907 = vmatpush1.xpose.msra.mxu0 0.0
      %908 = vmatprep.mubr.f32.mxu0 0.0
      %909 = vmatmul.mubr.f32.gmra.mrb[0].mxu0 %v834
      %v910 = vpop.f32.mrb[0].mxu0
      %v911 = vadd.f32 %v814, %v910
      %v912 = vpop.f32.mrb[0].mxu0
      %913 = vdwg.mxu0
      %v914 = vtanh.pop %v911
      %vm915 = vcmask 254976
      %916 = vst.msk [vmem:[#allocation7] sm:$0x3] %vm915, %v914
    $region25: #{tpu_custom_call.1} parent=1 // pred_fallthru
      _
    // Predicated region
    $region26: #{tpu_custom_call.1} parent=1 // pred_check
      _
    $region27: #{tpu_custom_call.1} parent=1 // pred_check_branch
      %918 = sbr.rel (0) target = $region29
    $region28: #{tpu_custom_call.1} parent=1 // pred_region
      %s920 = ssub.s32 32, 32
      %921 = vsyncadd [#allocation8], %s920
      %s923 = sshll.u32 [#allocation7], 4
      %s924 = int_to_ptr.vmem [resolvable:$true] %s923
      %926 = dma.vmem_to_hbm [thread:$0]  %s924, 32, %s4, [#allocation8]
    $region29: #{tpu_custom_call.1} parent=1 // pred_fallthru
      _
    // Predicated region
    $region30: #{tpu_custom_call.1} parent=1 // pred_check
      _
    $region31: #{tpu_custom_call.1} parent=1 // pred_check_branch
      %928 = sbr.rel (0) target = $region33
    $region32: #{tpu_custom_call.1} parent=1 // pred_region
      %s930 = ssub.s32 32, 32
      %931 = vsyncadd [#allocation10], %s930
      %s933 = sshll.u32 [#allocation9], 4
      %s934 = int_to_ptr.vmem [resolvable:$true] %s933
      %936 = dma.vmem_to_hbm [thread:$0]  %s934, 32, %s5, [#allocation10]
    $region33: #{tpu_custom_call.1} parent=1 // pred_fallthru
      _
    // Predicated region
    $region34: #{tpu_custom_call.1} parent=1 // pred_check
      _
    $region35: #{tpu_custom_call.1} parent=1 // pred_check_branch
      %938 = sbr.rel (0) target = $region37
    $region36: #{tpu_custom_call.1} parent=1 // pred_region
      %939 = dma.done [#allocation8], 32
    $region37: #{tpu_custom_call.1} parent=1 // pred_fallthru
      _
    // Predicated region
    $region38: #{tpu_custom_call.1} parent=1 // pred_check
      _
    $region39: #{tpu_custom_call.1} parent=1 // pred_check_branch
      %941 = sbr.rel (0) target = $region41
    $region40: #{tpu_custom_call.1} parent=1 // pred_region
      %942 = dma.done [#allocation10], 32
    $region41: #{tpu_custom_call.1} parent=1 // pred_fallthru
      _
    %943 = vsyncpa [#allocation8], 1
    %944 = vsyncpa [#allocation10], 1

</llo_original>
